<compile_context>
chip_gen: v7x
topology: tpu7x:2x2x1
jax: 0.10.0
libtpu: 0.0.40
codegen_flags: <defaults>
</compile_context>

<pallas_src>
import jax
import jax.numpy as jnp
from jax.experimental import pallas as pl
from jax.experimental.pallas import tpu as pltpu

_LANE = 128  # pad the tiny num_labels output up to one full lane group

_BUFFERED = getattr(pl, "Buffered", None)


def _spec(shape, index_map, *, buffers=None):
    """BlockSpec with optional buffer-count override (falls back gracefully)."""
    if buffers is not None and _BUFFERED is not None:
        try:
            return pl.BlockSpec(shape, index_map, pipeline_mode=_BUFFERED(buffers))
        except TypeError:
            pass  # older jax without pipeline_mode kwarg
    return pl.BlockSpec(shape, index_map)


def _vmem_budget_bytes():
    """~80% of physical per-core VMEM; conservative (v7x-safe) fallback."""
    try:
        cap = pltpu.get_tpu_info().vmem_capacity_bytes
        if cap:
            return int(cap * 0.80)
    except Exception:
        pass
    return int((64 << 20) * 0.80)  # v7x has 64 MiB per TensorCore


def _round_up(x, m):
    return ((x + m - 1) // m) * m


def _select_tiles(B, H, pad_n, x_bytes, w_bytes, vmem_budget,
                  tile_b=None, tile_h=None):
    # Hidden-dim tiling only when full weight residency is heavy (H > 1024).
    if tile_h is None:
        tile_h = H
        if H > 1024:
            for t in (1024, 512, 256, 128):
                if H % t == 0:
                    tile_h = t
                    break
    assert H % tile_h == 0, (H, tile_h)

    weights_const = tile_h == H
    n_w_buf = 1 if weights_const else 2  # Buffered(1) when constant index_map
    weight_bytes = (n_w_buf * (H * tile_h + tile_h + tile_h * pad_n) * w_bytes
                    + pad_n * w_bytes)

    def fits(tb):
        act = (2 * tb * H * x_bytes          # x tiles (double-buffered)
               + 2 * tb * pad_n * x_bytes    # out tiles (double-buffered)
               + tb * pad_n * 4              # f32 accumulator scratch
               + 2 * tb * tile_h * 4)        # f32 intermediates headroom
        return weight_bytes + act <= vmem_budget

    if tile_b is None:
        if B <= 256 and (B <= 8 or B % 8 == 0) and fits(B):
            tile_b = B
        else:
            cap = max(_round_up(B, 8), 8)
            tile_b = 8
            for t in (2048, 1024, 512, 256, 128, 64, 32, 16, 8):
                if t <= cap and fits(t):
                    tile_b = t
                    break
    return tile_b, tile_h, weights_const, weight_bytes


def _head_kernel(x_ref, w1_ref, b1_ref, w2_ref, b2_ref, o_ref, acc_ref):
    j = pl.program_id(1)

    @pl.when(j == 0)
    def _():
        acc_ref[...] = jnp.zeros_like(acc_ref)

    # dropout is identity at inference time.
    x = x_ref[...]

    # dense (this hidden-column slab): x @ W1[:, j] + b1[j], ReLU.
    # Native-dtype MXU feed, f32 accumulation.
    h = jnp.dot(x, w1_ref[...], preferred_element_type=jnp.float32)
    h = jnp.maximum(h + b1_ref[...].astype(jnp.float32), 0.0)

    # out_proj partial sum: h_j @ W2_pad[j, :]  (accumulated over j in f32).
    acc_ref[...] += jnp.dot(h.astype(w2_ref.dtype), w2_ref[...],
                            preferred_element_type=jnp.float32)

    @pl.when(j == pl.num_programs(1) - 1)
    def _():
        y = acc_ref[...] + b2_ref[...].astype(jnp.float32)
        o_ref[...] = y.astype(o_ref.dtype)


def albert_classification_head(x, w1, b1, w2, b2, *, tile_b=None, tile_h=None,
                               slice_output=True):
    """x: (B, H). w1: (H, H) [in,out], b1: (1, H), w2: (H, L) [in,out], b2: (1, L)."""
    B, H = x.shape
    num_labels = w2.shape[1]
    x_bytes = jnp.dtype(x.dtype).itemsize
    w_bytes = jnp.dtype(w1.dtype).itemsize

    # Zero-pad out_proj to a lane-dense 128-wide output (exact: padded columns
    # are all-zero and sliced off / ignored downstream).
    pad_n = max(_LANE, _round_up(num_labels, _LANE))
    w2_pad = jnp.pad(w2, ((0, 0), (0, pad_n - num_labels)))
    b2_pad = jnp.pad(b2, ((0, 0), (0, pad_n - num_labels)))

    vmem_budget = _vmem_budget_bytes()
    tile_b, tile_h, weights_const, weight_bytes = _select_tiles(
        B, H, pad_n, x_bytes, w_bytes, vmem_budget, tile_b=tile_b, tile_h=tile_h)

    # Pad the batch up to a tile multiple instead of falling back to tile_b=B.
    B_pad = _round_up(B, tile_b)
    x_in = x if B_pad == B else jnp.pad(x, ((0, B_pad - B), (0, 0)))

    nb = B_pad // tile_b
    nh = H // tile_h
    grid = (nb, nh)  # reduction (hidden) axis last, marked "arbitrary"

    # Cost estimate: two matmuls; weight HBM traffic repeats per batch tile
    # only when the hidden dim is tiled (weights not resident).
    weight_passes = 1 if weights_const else nb
    cost = pl.CostEstimate(
        flops=2 * B_pad * H * H + 2 * B_pad * H * pad_n,
        transcendentals=0,
        bytes_accessed=weight_passes * (H * H + H + H * pad_n + pad_n) * w_bytes
        + B_pad * H * x_bytes + B_pad * pad_n * x_bytes,
    )

    # VMEM estimate (matches _select_tiles.fits); clamp to per-generation budget,
    # never below a safe 32 MiB floor, never above ~80% of physical VMEM.
    vmem_est = (weight_bytes
                + 2 * tile_b * H * x_bytes
                + 2 * tile_b * pad_n * x_bytes
                + tile_b * pad_n * 4
                + 2 * tile_b * tile_h * 4)
    vmem_limit = int(min(vmem_budget, max(int(vmem_est * 1.25), 32 << 20)))

    w_buf = 1 if weights_const else None  # single-buffer only constant blocks

    out_pad = pl.pallas_call(
        _head_kernel,
        out_shape=jax.ShapeDtypeStruct((B_pad, pad_n), x.dtype),
        grid_spec=pltpu.PrefetchScalarGridSpec(
            num_scalar_prefetch=0,
            grid=grid,
            in_specs=[
                _spec((tile_b, H), lambda i, j: (i, 0)),                   # x tile
                _spec((H, tile_h), lambda i, j: (0, j), buffers=w_buf),    # W1 slab
                _spec((1, tile_h), lambda i, j: (0, j), buffers=w_buf),    # b1 slab
                _spec((tile_h, pad_n), lambda i, j: (j, 0), buffers=w_buf),  # W2 slab
                _spec((1, pad_n), lambda i, j: (0, 0), buffers=1),         # b2 (const)
            ],
            out_specs=pl.BlockSpec((tile_b, pad_n), lambda i, j: (i, 0)),
            scratch_shapes=[pltpu.VMEM((tile_b, pad_n), jnp.float32)],
        ),
        compiler_params=pltpu.CompilerParams(
            dimension_semantics=("parallel", "arbitrary"),
            vmem_limit_bytes=vmem_limit,
        ),
        cost_estimate=cost,
    )(x_in, w1, b1, w2_pad, b2_pad)

    if not slice_output:
        return out_pad[:B]  # consumer may use the padded (B, 128) logits directly
    return out_pad[:B, :num_labels]


def init_params(key, hidden_size, num_labels=2, dtype=jnp.float32):
    """Synthetic params matching nn.Linear init; stored transposed as (in, out)."""
    k1, k2, k3, k4 = jax.random.split(key, 4)
    bound1 = 1.0 / jnp.sqrt(hidden_size)
    w1_t = jax.random.uniform(k1, (hidden_size, hidden_size), dtype,
                              minval=-bound1, maxval=bound1)
    b1 = jax.random.uniform(k2, (1, hidden_size), dtype,
                            minval=-bound1, maxval=bound1)
    w2_t = jax.random.uniform(k3, (hidden_size, num_labels), dtype,
                              minval=-bound1, maxval=bound1)
    b2 = jax.random.uniform(k4, (1, num_labels), dtype,
                            minval=-bound1, maxval=bound1)
    return w1_t, b1, w2_t, b2


def reference(x, w1, b1, w2, b2):
    h = jnp.maximum(x @ w1 + b1, 0.0)
    return h @ w2 + b2


if __name__ == "__main__":
    num_labels = 2
    key = jax.random.PRNGKey(0)
    kx, kp, kx2, kp2 = jax.random.split(key, 4)

    # ---- 1) small shapes, f32, weights resident (single hidden step) --------
    batch, hidden = 16, 32
    x = jax.random.normal(kx, (batch, hidden), jnp.float32)
    w1, b1, w2, b2 = init_params(kp, hidden, num_labels)
    ref = reference(x, w1, b1, w2, b2)

    out = jax.block_until_ready(albert_classification_head(x, w1, b1, w2, b2))
    assert out.shape == (batch, num_labels), out.shape
    assert jnp.allclose(out, ref, atol=1e-5, rtol=1e-5), \
        f"f32 max err {jnp.max(jnp.abs(out - ref))}"

    # ---- 2) hidden-dim tiled reduction path (accumulator + pl.when) ---------
    batch2, hidden2 = 24, 256
    x2 = jax.random.normal(kx2, (batch2, hidden2), jnp.float32)
    p2 = init_params(kp2, hidden2, num_labels)
    ref2 = reference(x2, *p2)
    out2 = jax.block_until_ready(
        albert_classification_head(x2, *p2, tile_b=8, tile_h=128))
    assert jnp.allclose(out2, ref2, atol=1e-4, rtol=1e-4), \
        f"tiled max err {jnp.max(jnp.abs(out2 - ref2))}"

    # ---- 3) non-divisible batch -> batch-padding path ------------------------
    x3 = x2[:10]
    ref3 = reference(x3, *p2)
    out3 = jax.block_until_ready(
        albert_classification_head(x3, *p2, tile_b=8))
    assert out3.shape == (10, num_labels), out3.shape
    assert jnp.allclose(out3, ref3, atol=1e-4, rtol=1e-4), \
        f"padded-batch max err {jnp.max(jnp.abs(out3 - ref3))}"

    # ---- 4) bf16 weights/activations fed natively to the MXU -----------------
    xb = x.astype(jnp.bfloat16)
    w1b, b1b, w2b, b2b = (p.astype(jnp.bfloat16) for p in (w1, b1, w2, b2))
    out_bf = jax.block_until_ready(
        albert_classification_head(xb, w1b, b1b, w2b, b2b))
    assert jnp.allclose(out_bf.astype(jnp.float32), ref, atol=1e-1, rtol=1e-1), \
        f"bf16 max err {jnp.max(jnp.abs(out_bf.astype(jnp.float32) - ref))}"

    print("KERNEL_OK")
</pallas_src>

<mosaic_0001>
module attributes {stable_mosaic.version = 11 : i64} {
  func.func @_head_kernel(%arg0: i32, %arg1: i32, %arg2: memref<16x32xf32, #tpu.memory_space<vmem>>, %arg3: memref<32x32xf32, #tpu.memory_space<vmem>>, %arg4: memref<1x32xf32, #tpu.memory_space<vmem>>, %arg5: memref<32x128xf32, #tpu.memory_space<vmem>>, %arg6: memref<1x128xf32, #tpu.memory_space<vmem>>, %arg7: memref<16x128xf32, #tpu.memory_space<vmem>>, %arg8: memref<16x128xf32, #tpu.memory_space<vmem>>) attributes {dimension_semantics = [#tpu.dimension_semantics<parallel>, #tpu.dimension_semantics<arbitrary>], iteration_bounds = array<i64: 1, 1>, scalar_prefetch = 0 : i64, scratch_operands = 1 : i64, tpu.core_type = #tpu.core_type<tc>, window_params = [{transform_indices = @transform_0, window_bounds = array<i64: 16, 32>}, {pipeline_mode = #tpu.pipeline_mode<synchronous>, transform_indices = @transform_1, window_bounds = array<i64: 32, 32>}, {pipeline_mode = #tpu.pipeline_mode<synchronous>, transform_indices = @transform_2, window_bounds = array<i64: 1, 32>}, {pipeline_mode = #tpu.pipeline_mode<synchronous>, transform_indices = @transform_3, window_bounds = array<i64: 32, 128>}, {pipeline_mode = #tpu.pipeline_mode<synchronous>, transform_indices = @transform_4, window_bounds = array<i64: 1, 128>}, {transform_indices = @transform_5, window_bounds = array<i64: 16, 128>}]} {
    %c0_i32 = arith.constant 0 : i32
    %0 = arith.cmpi eq, %arg1, %c0_i32 : i32
    %1 = arith.extui %0 : i1 to i32
    %c0_i32_0 = arith.constant 0 : i32
    %2 = arith.cmpi ne, %1, %c0_i32_0 : i32
    scf.if %2 {
      %cst_16 = arith.constant 0.000000e+00 : f32
      %19 = vector.broadcast %cst_16 : f32 to vector<16x128xf32>
      %c0_17 = arith.constant 0 : index
      %c0_18 = arith.constant 0 : index
      %20 = vector.load %arg8[%c0_17, %c0_18] : memref<16x128xf32, #tpu.memory_space<vmem>>, vector<16x128xf32>
      tpu.vector_store %arg8[%c0_17, %c0_18], %19 {strides = array<i32>} : memref<16x128xf32, #tpu.memory_space<vmem>>, vector<16x128xf32>,
    } else {
    }
    %c0 = arith.constant 0 : index
    %c0_1 = arith.constant 0 : index
    %3 = vector.load %arg2[%c0, %c0_1] : memref<16x32xf32, #tpu.memory_space<vmem>>, vector<16x32xf32>
    %c0_2 = arith.constant 0 : index
    %c0_3 = arith.constant 0 : index
    %4 = vector.load %arg3[%c0_2, %c0_3] : memref<32x32xf32, #tpu.memory_space<vmem>>, vector<32x32xf32>
    %cst = arith.constant dense<0.000000e+00> : vector<16x32xf32>
    %5 = tpu.matmul %3, %4, %cst {dimension_numbers = #tpu.dot_dimension_numbers<[1], [0], [0], [1], [0, 0, 1, 1], [], []>} : vector<16x32xf32>, vector<32x32xf32>, vector<16x32xf32> -> vector<16x32xf32>
    %c0_4 = arith.constant 0 : index
    %c0_5 = arith.constant 0 : index
    %6 = vector.load %arg4[%c0_4, %c0_5] : memref<1x32xf32, #tpu.memory_space<vmem>>, vector<1x32xf32>
    %7 = vector.broadcast %6 : vector<1x32xf32> to vector<16x32xf32>
    %8 = arith.addf %5, %7 : vector<16x32xf32>
    %cst_6 = arith.constant 0.000000e+00 : f32
    %9 = vector.broadcast %cst_6 : f32 to vector<16x32xf32>
    %10 = arith.maximumf %8, %9 : vector<16x32xf32>
    %c0_7 = arith.constant 0 : index
    %c0_8 = arith.constant 0 : index
    %11 = vector.load %arg8[%c0_7, %c0_8] : memref<16x128xf32, #tpu.memory_space<vmem>>, vector<16x128xf32>
    %c0_9 = arith.constant 0 : index
    %c0_10 = arith.constant 0 : index
    %12 = vector.load %arg5[%c0_9, %c0_10] : memref<32x128xf32, #tpu.memory_space<vmem>>, vector<32x128xf32>
    %cst_11 = arith.constant dense<0.000000e+00> : vector<16x128xf32>
    %13 = tpu.matmul %10, %12, %cst_11 {dimension_numbers = #tpu.dot_dimension_numbers<[1], [0], [0], [1], [0, 0, 1, 1], [], []>} : vector<16x32xf32>, vector<32x128xf32>, vector<16x128xf32> -> vector<16x128xf32>
    %14 = arith.addf %11, %13 : vector<16x128xf32>
    %c0_12 = arith.constant 0 : index
    %c0_13 = arith.constant 0 : index
    %15 = vector.load %arg8[%c0_12, %c0_13] : memref<16x128xf32, #tpu.memory_space<vmem>>, vector<16x128xf32>
    tpu.vector_store %arg8[%c0_12, %c0_13], %14 {strides = array<i32>} : memref<16x128xf32, #tpu.memory_space<vmem>>, vector<16x128xf32>,
    %c0_i32_14 = arith.constant 0 : i32
    %16 = arith.cmpi eq, %arg1, %c0_i32_14 : i32
    %17 = arith.extui %16 : i1 to i32
    %c0_i32_15 = arith.constant 0 : i32
    %18 = arith.cmpi ne, %17, %c0_i32_15 : i32
    scf.if %18 {
      %c0_16 = arith.constant 0 : index
      %c0_17 = arith.constant 0 : index
      %19 = vector.load %arg8[%c0_16, %c0_17] : memref<16x128xf32, #tpu.memory_space<vmem>>, vector<16x128xf32>
      %c0_18 = arith.constant 0 : index
      %c0_19 = arith.constant 0 : index
      %20 = vector.load %arg6[%c0_18, %c0_19] : memref<1x128xf32, #tpu.memory_space<vmem>>, vector<1x128xf32>
      %21 = vector.broadcast %20 : vector<1x128xf32> to vector<16x128xf32>
      %22 = arith.addf %19, %21 : vector<16x128xf32>
      %c0_20 = arith.constant 0 : index
      %c0_21 = arith.constant 0 : index
      %23 = vector.load %arg7[%c0_20, %c0_21] : memref<16x128xf32, #tpu.memory_space<vmem>>, vector<16x128xf32>
      tpu.vector_store %arg7[%c0_20, %c0_21], %22 {strides = array<i32>} : memref<16x128xf32, #tpu.memory_space<vmem>>, vector<16x128xf32>,
    } else {
    }
    return
  }
  func.func @transform_0(%arg0: i32, %arg1: i32) -> (i32, i32) {
    %c0_i32 = arith.constant 0 : i32
    %c0_i32_0 = arith.constant 0 : i32
    return %arg0, %c0_i32 : i32, i32
  }
  func.func @transform_1(%arg0: i32, %arg1: i32) -> (i32, i32) {
    %c0_i32 = arith.constant 0 : i32
    %c0_i32_0 = arith.constant 0 : i32
    return %c0_i32, %arg1 : i32, i32
  }
  func.func @transform_2(%arg0: i32, %arg1: i32) -> (i32, i32) {
    %c0_i32 = arith.constant 0 : i32
    %c0_i32_0 = arith.constant 0 : i32
    return %c0_i32, %arg1 : i32, i32
  }
  func.func @transform_3(%arg0: i32, %arg1: i32) -> (i32, i32) {
    %c0_i32 = arith.constant 0 : i32
    %c0_i32_0 = arith.constant 0 : i32
    return %arg1, %c0_i32 : i32, i32
  }
  func.func @transform_4(%arg0: i32, %arg1: i32) -> (i32, i32) {
    %c0_i32 = arith.constant 0 : i32
    %c0_i32_0 = arith.constant 0 : i32
    %c0_i32_1 = arith.constant 0 : i32
    return %c0_i32, %c0_i32_0 : i32, i32
  }
  func.func @transform_5(%arg0: i32, %arg1: i32) -> (i32, i32) {
    %c0_i32 = arith.constant 0 : i32
    %c0_i32_0 = arith.constant 0 : i32
    return %arg0, %c0_i32 : i32, i32
  }
}

</mosaic_0001>

<llo_original>
// kernel: tpu_custom_call.1
$region0: #{tpu_custom_call.1}
  #allocation0 [shape = 'u32[]', space=smem, size = 0x4, offset = 0x4, fixed_abs, tag = 'smem constant byte address 0x4 - core index']
  #allocation1 [shape = 'u32[144,128]{1,0:T(1,128)}', space=vmem, size = 0x12000, scoped, tag = 'internal scratch']
  #allocation2 [shape = 'f32[16,128]{1,0:T(8,128)}', space=vmem, size = 0x2000, scoped, tag = 'scratch operand']
  %s0 = inlined_call_operand.hbm [shape: f32[16,32], index: 0, kind: input, shape index: {}]
  %s1 = inlined_call_operand.hbm [shape: f32[32,32], index: 1, kind: input, shape index: {}]
  %s2 = inlined_call_operand.vmem [shape: f32[1,32], index: 2, kind: input, shape index: {}]
  %s3 = inlined_call_operand.hbm [shape: f32[32,128], index: 3, kind: input, shape index: {}]
  %s4 = inlined_call_operand.vmem [shape: f32[1,128], index: 4, kind: input, shape index: {}]
  %s5 = inlined_call_operand.hbm [shape: f32[16,128], index: 5, kind: output, shape index: {}]
  %s6 = sld [smem:[#allocation0]]
  $region50: #{tpu_custom_call.1} parent=0
    _
  %s8 = ssub.s32 1, %s6
  %s9 = scalar_select 0, %s8, %s6
  $region1: #{tpu_custom_call.1} parent=0
    #allocation3 [shape = 'u8[8192]{0}', space=vmem, size = 0x2000, scoped, tag = 'input window, operand 0, single buffered']
    #allocation4 [shape = 's32[1]{0}', space=sflag, size = 0x4, scoped, tag = 'scoped memory for tpu_custom_call.1']
    #allocation5 [shape = 's32[1]{0}', space=sflag, size = 0x4, scoped, tag = 'scoped memory for tpu_custom_call.1']
    #allocation6 [shape = 'u8[16384]{0}', space=vmem, size = 0x4000, scoped, tag = 'input window, operand 1, single buffered']
    #allocation7 [shape = 's32[1]{0}', space=sflag, size = 0x4, scoped, tag = 'scoped memory for tpu_custom_call.1']
    #allocation8 [shape = 'u8[16384]{0}', space=vmem, size = 0x4000, scoped, tag = 'input window, operand 3, single buffered']
    #allocation9 [shape = 'u8[8192]{0}', space=vmem, size = 0x2000, scoped, tag = 'output window, operand 0, single buffered']
    %10 = vsyncpa [#allocation4], 0
    %11 = vsyncpa [#allocation7], 0
    %12 = vsyncpa [#allocation5], 0
    // Predicated region
    $region2: #{tpu_custom_call.1} parent=1 // pred_check
      _
    $region3: #{tpu_custom_call.1} parent=1 // pred_check_branch
      %14 = sbr.rel (0) target = $region5
    $region4: #{tpu_custom_call.1} parent=1 // pred_region
      %s16 = ssub.s32 256, 256
      %17 = vsyncadd [#allocation4], %s16
      %s18 = sshll.u32 [#allocation3], 4
      %s19 = int_to_ptr.vmem [resolvable:$true] %s18
      %24 = dma.hbm_to_vmem [thread:$0]  %s0, 256, %s19, [#allocation4], 128, 128, 8
    $region5: #{tpu_custom_call.1} parent=1 // pred_fallthru
      _
    // Predicated region
    $region6: #{tpu_custom_call.1} parent=1 // pred_check
      _
    $region7: #{tpu_custom_call.1} parent=1 // pred_check_branch
      %26 = sbr.rel (0) target = $region9
    $region8: #{tpu_custom_call.1} parent=1 // pred_region
      %s28 = ssub.s32 512, 512
      %29 = vsyncadd [#allocation7], %s28
      %s30 = sshll.u32 [#allocation6], 4
      %s31 = int_to_ptr.vmem [resolvable:$true] %s30
      %36 = dma.hbm_to_vmem [thread:$0]  %s1, 512, %s31, [#allocation7], 128, 128, 8
    $region9: #{tpu_custom_call.1} parent=1 // pred_fallthru
      _
    // Predicated region
    $region10: #{tpu_custom_call.1} parent=1 // pred_check
      _
    $region11: #{tpu_custom_call.1} parent=1 // pred_check_branch
      %38 = sbr.rel (0) target = $region13
    $region12: #{tpu_custom_call.1} parent=1 // pred_region
      _
    $region13: #{tpu_custom_call.1} parent=1 // pred_fallthru
      _
    // Predicated region
    $region14: #{tpu_custom_call.1} parent=1 // pred_check
      _
    $region15: #{tpu_custom_call.1} parent=1 // pred_check_branch
      %40 = sbr.rel (0) target = $region17
    $region16: #{tpu_custom_call.1} parent=1 // pred_region
      %s42 = ssub.s32 512, 512
      %43 = vsyncadd [#allocation7], %s42
      %s44 = sshll.u32 [#allocation8], 4
      %s45 = int_to_ptr.vmem [resolvable:$true] %s44
      %50 = dma.hbm_to_vmem [thread:$0]  %s3, 512, %s45, [#allocation7], 128, 128, 8
    $region17: #{tpu_custom_call.1} parent=1 // pred_fallthru
      _
    // Predicated region
    $region18: #{tpu_custom_call.1} parent=1 // pred_check
      _
    $region19: #{tpu_custom_call.1} parent=1 // pred_check_branch
      %52 = sbr.rel (0) target = $region21
    $region20: #{tpu_custom_call.1} parent=1 // pred_region
      _
    $region21: #{tpu_custom_call.1} parent=1 // pred_fallthru
      _
    // Predicated region
    $region22: #{tpu_custom_call.1} parent=1 // pred_check
      _
    $region23: #{tpu_custom_call.1} parent=1 // pred_check_branch
      %54 = sbr.rel (0) target = $region25
    $region24: #{tpu_custom_call.1} parent=1 // pred_region
      %55 = dma.done [#allocation4], 256
    $region25: #{tpu_custom_call.1} parent=1 // pred_fallthru
      _
    // Predicated region
    $region26: #{tpu_custom_call.1} parent=1 // pred_check
      _
    $region27: #{tpu_custom_call.1} parent=1 // pred_check_branch
      %57 = sbr.rel (0) target = $region29
    $region28: #{tpu_custom_call.1} parent=1 // pred_region
      %58 = dma.done [#allocation7], 512
    $region29: #{tpu_custom_call.1} parent=1 // pred_fallthru
      _
    // Predicated region
    $region30: #{tpu_custom_call.1} parent=1 // pred_check
      _
    $region31: #{tpu_custom_call.1} parent=1 // pred_check_branch
      %60 = sbr.rel (0) target = $region33
    $region32: #{tpu_custom_call.1} parent=1 // pred_region
      %61 = dma.done [#allocation7], 512
    $region33: #{tpu_custom_call.1} parent=1 // pred_fallthru
      _
    %p62 = scmp.eq.s32.totalorder 0, 0
    // Predicated region
    $region34: #{tpu_custom_call.1} parent=1 // pred_check
      %p63 = pneg %p62
    $region35: #{tpu_custom_call.1} parent=1 // pred_check_branch
      %65 = sbr.rel (%p63) target = $region37
    $region36: #{tpu_custom_call.1} parent=1 // pred_region
      %66 = vst [vmem:[#allocation2] sm:$0xff] 0.0
      %67 = vst [vmem:[#allocation2 + $0x8] sm:$0xff] 0.0
    $region37: #{tpu_custom_call.1} parent=1 // pred_fallthru
      _
    %v68 = vld [vmem:[#allocation3] sm:$0xff]
    %v69 = vld [vmem:[#allocation3 + $0x8] sm:$0xff]
    %v70 = vld [vmem:[#allocation6] sm:$0xff]
    %v71 = vld [vmem:[#allocation6 + $0x8] sm:$0xff]
    %v72 = vld [vmem:[#allocation6 + $0x10] sm:$0xff]
    %v73 = vld [vmem:[#allocation6 + $0x18] sm:$0xff]
    %v74 = vld [vmem:[%s2] sm:$0x1]
    %v76 = vlaneseq
    %v77 = vshrl.u32 %v76, 7
    %v78 = vsub.s32 0, %v77
    %v79 = vrot.slane %v74, %v78
    %vm81 = vcmask 261120
    %v83 = vsel %vm81, %v68, 0
    %v86 = vsel %vm81, %v69, 0
    %88 = vmatprep.subr.mxu0 0.0
    %89 = vmatpush1.msra.mxu0 %v70
    %90 = vmatprep.subr.mxu0 0.0
    %91 = vmatpush1.msra.mxu0 %v71
    %92 = vmatprep.subr.mxu0 0.0
    %93 = vmatpush1.msra.mxu0 %v72
    %94 = vmatprep.subr.mxu0 0.0
    %95 = vmatpush1.msra.mxu0 %v73
    %96 = vmatprep.subr.mxu0 0.0
    %97 = vmatpush1.msra.mxu0 0.0
    %98 = vmatprep.subr.mxu0 0.0
    %99 = vmatpush1.msra.mxu0 0.0
    %100 = vmatprep.subr.mxu0 0.0
    %101 = vmatpush1.msra.mxu0 0.0
    %102 = vmatprep.subr.mxu0 0.0
    %103 = vmatpush1.msra.mxu0 0.0
    %104 = vmatprep.subr.mxu0 0.0
    %105 = vmatpush1.msra.mxu0 0.0
    %106 = vmatprep.subr.mxu0 0.0
    %107 = vmatpush1.msra.mxu0 0.0
    %108 = vmatprep.subr.mxu0 0.0
    %109 = vmatpush1.msra.mxu0 0.0
    %110 = vmatprep.subr.mxu0 0.0
    %111 = vmatpush1.msra.mxu0 0.0
    %112 = vmatprep.subr.mxu0 0.0
    %113 = vmatpush1.msra.mxu0 0.0
    %114 = vmatprep.subr.mxu0 0.0
    %115 = vmatpush1.msra.mxu0 0.0
    %116 = vmatprep.subr.mxu0 0.0
    %117 = vmatpush1.msra.mxu0 0.0
    %118 = vmatprep.subr.mxu0 0.0
    %119 = vmatpush1.msra.mxu0 0.0
    %120 = vmatprep.subr.mxu0 0.0
    %121 = vmatpush1.msra.mxu0 0.0
    %122 = vmatprep.subr.mxu0 0.0
    %123 = vmatpush1.msra.mxu0 0.0
    %124 = vmatprep.subr.mxu0 0.0
    %125 = vmatpush1.msra.mxu0 0.0
    %126 = vmatprep.subr.mxu0 0.0
    %127 = vmatpush1.msra.mxu0 0.0
    %128 = vmatprep.subr.mxu0 0.0
    %129 = vmatpush1.msra.mxu0 0.0
    %130 = vmatprep.subr.mxu0 0.0
    %131 = vmatpush1.msra.mxu0 0.0
    %132 = vmatprep.subr.mxu0 0.0
    %133 = vmatpush1.msra.mxu0 0.0
    %134 = vmatprep.subr.mxu0 0.0
    %135 = vmatpush1.msra.mxu0 0.0
    %136 = vmatprep.subr.mxu0 0.0
    %137 = vmatpush1.msra.mxu0 0.0
    %138 = vmatprep.subr.mxu0 0.0
    %139 = vmatpush1.msra.mxu0 0.0
    %140 = vmatprep.subr.mxu0 0.0
    %141 = vmatpush1.msra.mxu0 0.0
    %142 = vmatprep.subr.mxu0 0.0
    %143 = vmatpush1.msra.mxu0 0.0
    %144 = vmatprep.subr.mxu0 0.0
    %145 = vmatpush1.msra.mxu0 0.0
    %146 = vmatprep.subr.mxu0 0.0
    %147 = vmatpush1.msra.mxu0 0.0
    %148 = vmatprep.subr.mxu0 0.0
    %149 = vmatpush1.msra.mxu0 0.0
    %150 = vmatprep.subr.mxu0 0.0
    %151 = vmatpush1.msra.mxu0 0.0
    %152 = vmatprep.mubr.f32.mxu0 0.0
    %153 = vmatmul.mubr.f32.gmra.mrb[0].mxu0 %v83
    %v154 = vpop.f32.mrb[0].mxu0
    %v155 = vadd.f32 %v79, %v154
    %v156 = vpop.f32.mrb[0].mxu0
    %157 = vmatprep.mubr.f32.mxu0 0.0
    %158 = vmatmul.mubr.f32.gmra.mrb[0].mxu0 %v86
    %v159 = vpop.f32.mrb[0].mxu0
    %v160 = vadd.f32 %v79, %v159
    %v161 = vpop.f32.mrb[0].mxu0
    %162 = vdwg.mxu0
    %v163 = vmax.f32 %v155, 0.0
    %v164 = vmax.f32 %v160, 0.0
    %v165 = vld [vmem:[#allocation2] sm:$0xff]
    %v166 = vld [vmem:[#allocation2 + $0x8] sm:$0xff]
    %v167 = vld [vmem:[#allocation8] sm:$0xff]
    %v168 = vld [vmem:[#allocation8 + $0x8] sm:$0xff]
    %v169 = vld [vmem:[#allocation8 + $0x10] sm:$0xff]
    %v170 = vld [vmem:[#allocation8 + $0x18] sm:$0xff]
    %v172 = vsel %vm81, %v163, 0
    %v175 = vsel %vm81, %v164, 0
    %177 = vmatprep.subr.mxu0 0.0
    %178 = vmatpush1.msra.mxu0 %v167
    %179 = vmatprep.subr.mxu0 0.0
    %180 = vmatpush1.msra.mxu0 %v168
    %181 = vmatprep.subr.mxu0 0.0
    %182 = vmatpush1.msra.mxu0 %v169
    %183 = vmatprep.subr.mxu0 0.0
    %184 = vmatpush1.msra.mxu0 %v170
    %185 = vmatprep.subr.mxu0 0.0
    %186 = vmatpush1.msra.mxu0 0.0
    %187 = vmatprep.subr.mxu0 0.0
    %188 = vmatpush1.msra.mxu0 0.0
    %189 = vmatprep.subr.mxu0 0.0
    %190 = vmatpush1.msra.mxu0 0.0
    %191 = vmatprep.subr.mxu0 0.0
    %192 = vmatpush1.msra.mxu0 0.0
    %193 = vmatprep.subr.mxu0 0.0
    %194 = vmatpush1.msra.mxu0 0.0
    %195 = vmatprep.subr.mxu0 0.0
    %196 = vmatpush1.msra.mxu0 0.0
    %197 = vmatprep.subr.mxu0 0.0
    %198 = vmatpush1.msra.mxu0 0.0
    %199 = vmatprep.subr.mxu0 0.0
    %200 = vmatpush1.msra.mxu0 0.0
    %201 = vmatprep.subr.mxu0 0.0
    %202 = vmatpush1.msra.mxu0 0.0
    %203 = vmatprep.subr.mxu0 0.0
    %204 = vmatpush1.msra.mxu0 0.0
    %205 = vmatprep.subr.mxu0 0.0
    %206 = vmatpush1.msra.mxu0 0.0
    %207 = vmatprep.subr.mxu0 0.0
    %208 = vmatpush1.msra.mxu0 0.0
    %209 = vmatprep.subr.mxu0 0.0
    %210 = vmatpush1.msra.mxu0 0.0
    %211 = vmatprep.subr.mxu0 0.0
    %212 = vmatpush1.msra.mxu0 0.0
    %213 = vmatprep.subr.mxu0 0.0
    %214 = vmatpush1.msra.mxu0 0.0
    %215 = vmatprep.subr.mxu0 0.0
    %216 = vmatpush1.msra.mxu0 0.0
    %217 = vmatprep.subr.mxu0 0.0
    %218 = vmatpush1.msra.mxu0 0.0
    %219 = vmatprep.subr.mxu0 0.0
    %220 = vmatpush1.msra.mxu0 0.0
    %221 = vmatprep.subr.mxu0 0.0
    %222 = vmatpush1.msra.mxu0 0.0
    %223 = vmatprep.subr.mxu0 0.0
    %224 = vmatpush1.msra.mxu0 0.0
    %225 = vmatprep.subr.mxu0 0.0
    %226 = vmatpush1.msra.mxu0 0.0
    %227 = vmatprep.subr.mxu0 0.0
    %228 = vmatpush1.msra.mxu0 0.0
    %229 = vmatprep.subr.mxu0 0.0
    %230 = vmatpush1.msra.mxu0 0.0
    %231 = vmatprep.subr.mxu0 0.0
    %232 = vmatpush1.msra.mxu0 0.0
    %233 = vmatprep.subr.mxu0 0.0
    %234 = vmatpush1.msra.mxu0 0.0
    %235 = vmatprep.subr.mxu0 0.0
    %236 = vmatpush1.msra.mxu0 0.0
    %237 = vmatprep.subr.mxu0 0.0
    %238 = vmatpush1.msra.mxu0 0.0
    %239 = vmatprep.subr.mxu0 0.0
    %240 = vmatpush1.msra.mxu0 0.0
    %241 = vmatprep.mubr.f32.mxu0 0.0
    %242 = vmatmul.mubr.f32.gmra.mrb[0].mxu0 %v172
    %v243 = vpop.f32.mrb[0].mxu0
    %v244 = vadd.f32 0.0, %v243
    %v245 = vpop.f32.mrb[0].mxu0
    %246 = vmatprep.mubr.f32.mxu0 0.0
    %247 = vmatmul.mubr.f32.gmra.mrb[0].mxu0 %v175
    %v248 = vpop.f32.mrb[0].mxu0
    %v249 = vadd.f32 0.0, %v248
    %v250 = vpop.f32.mrb[0].mxu0
    %251 = vdwg.mxu0
    %v252 = vadd.f32 %v165, %v244
    %v253 = vadd.f32 %v166, %v249
    %254 = vst [vmem:[#allocation2] sm:$0xff] %v252
    %255 = vst [vmem:[#allocation2 + $0x8] sm:$0xff] %v253
    // Predicated region
    $region38: #{tpu_custom_call.1} parent=1 // pred_check
      %p256 = pneg %p62
    $region39: #{tpu_custom_call.1} parent=1 // pred_check_branch
      %258 = sbr.rel (%p256) target = $region41
    $region40: #{tpu_custom_call.1} parent=1 // pred_region
      %v259 = vld [vmem:[#allocation2] sm:$0xff]
      %v260 = vld [vmem:[#allocation2 + $0x8] sm:$0xff]
      %v261 = vld [vmem:[%s4] sm:$0x1]
      %v263 = vlaneseq
      %v264 = vshrl.u32 %v263, 7
      %v265 = vsub.s32 0, %v264
      %v266 = vrot.slane %v261, %v265
      %v268 = vadd.f32 %v259, %v266
      %v269 = vadd.f32 %v260, %v266
      %270 = vst [vmem:[#allocation9] sm:$0xff] %v268
      %271 = vst [vmem:[#allocation9 + $0x8] sm:$0xff] %v269
    $region41: #{tpu_custom_call.1} parent=1 // pred_fallthru
      _
    // Predicated region
    $region42: #{tpu_custom_call.1} parent=1 // pred_check
      _
    $region43: #{tpu_custom_call.1} parent=1 // pred_check_branch
      %273 = sbr.rel (0) target = $region45
    $region44: #{tpu_custom_call.1} parent=1 // pred_region
      %s275 = ssub.s32 256, 256
      %276 = vsyncadd [#allocation5], %s275
      %s277 = sshll.u32 [#allocation9], 4
      %s278 = int_to_ptr.vmem [resolvable:$true] %s277
      %283 = dma.vmem_to_hbm [thread:$0]  %s278, 256, %s5, [#allocation5], 128, 128, 8
    $region45: #{tpu_custom_call.1} parent=1 // pred_fallthru
      _
    // Predicated region
    $region46: #{tpu_custom_call.1} parent=1 // pred_check
      _
    $region47: #{tpu_custom_call.1} parent=1 // pred_check_branch
      %285 = sbr.rel (0) target = $region49
    $region48: #{tpu_custom_call.1} parent=1 // pred_region
      %286 = dma.done [#allocation5], 256
    $region49: #{tpu_custom_call.1} parent=1 // pred_fallthru
      _
    %287 = vsyncpa [#allocation4], 1
    %288 = vsyncpa [#allocation7], 1
    %289 = vsyncpa [#allocation5], 1

</llo_original>
